<compile_context>
chip_gen: v7x
topology: tpu7x:2x2x1
jax: 0.10.0
libtpu: 0.0.40
codegen_flags: <defaults>
</compile_context>

<pallas_src>
import math

import jax
import jax.numpy as jnp
from jax.experimental import pallas as pl
from jax.experimental.pallas import tpu as pltpu

_SHIFT = math.log(2.0)
_LANES = 1024


def _shifted_softplus_kernel(x_ref, o_ref):
    # Native-dtype load, f32 math in vregs, native-dtype store.
    x = x_ref[...].astype(jnp.float32)
    sp = jnp.maximum(x, 0.0) + jnp.log1p(jnp.exp(-jnp.abs(x)))
    o_ref[...] = (sp - _SHIFT).astype(o_ref.dtype)


def _sublane_multiple(dtype) -> int:
    # Sublane packing: 8 rows for 4-byte, 16 for 2-byte, 32 for 1-byte dtypes.
    return {4: 8, 2: 16, 1: 32}.get(jnp.dtype(dtype).itemsize, 8)


def _vmem_limit_bytes() -> int:
    # 64 MiB on chips with 128 MiB VMEM (v5e/v6e); 32 MiB otherwise (v7x: 64 MiB/TC).
    default = 32 * 1024 * 1024
    try:
        cap = int(pltpu.get_tpu_info().vmem_capacity_bytes)
    except Exception:
        return default
    return 64 * 1024 * 1024 if cap >= 128 * 1024 * 1024 else default


def shifted_softplus(x, *, block_rows=1024, lanes=_LANES):
    """ShiftedSoftplus over an arbitrarily-shaped float array via Pallas."""
    orig_shape = x.shape
    if not jnp.issubdtype(x.dtype, jnp.floating):
        x = x.astype(jnp.float32)
    dtype = x.dtype
    n = int(x.size)
    if n == 0:
        return jnp.zeros(orig_shape, dtype)

    sub = _sublane_multiple(dtype)
    row_tile = lanes * sub  # smallest legal 2-D slab granule

    xf = x.reshape(-1)
    padded = ((n + row_tile - 1) // row_tile) * row_tile
    needs_pad = padded != n
    if needs_pad:
        # Tail-only pad (< lanes*sub elements), not a full-tile pad.
        # Stable softplus form is safe on the zero-filled tail.
        xf = jnp.pad(xf, (0, padded - n))

    m_total = padded // lanes
    x2 = xf.reshape(m_total, lanes)

    # Block sizing: a multiple of the sublane tile, no larger than the array,
    # and chosen so the grid has >= 2 steps when there is enough data — on v7x
    # the "parallel" axis shards grid steps across the two TensorCores.
    block_rows = max(sub, (min(block_rows, m_total) // sub) * sub)
    if m_total >= 2 * sub:
        half = max(sub, (m_total // 2 // sub) * sub)
        block_rows = min(block_rows, half)
    grid = (pl.cdiv(m_total, block_rows),)

    itemsize = jnp.dtype(dtype).itemsize
    cost = pl.CostEstimate(
        flops=4 * n,
        transcendentals=2 * n,
        bytes_accessed=2 * n * itemsize,
    )

    out2 = pl.pallas_call(
        _shifted_softplus_kernel,
        out_shape=jax.ShapeDtypeStruct((m_total, lanes), dtype),
        grid=grid,
        in_specs=[pl.BlockSpec((block_rows, lanes), lambda i: (i, 0))],
        out_specs=pl.BlockSpec((block_rows, lanes), lambda i: (i, 0)),
        compiler_params=pltpu.CompilerParams(
            dimension_semantics=("parallel",),
            vmem_limit_bytes=_vmem_limit_bytes(),
        ),
        cost_estimate=cost,
    )(x2)

    if needs_pad:
        return out2.reshape(-1)[:n].reshape(orig_shape)
    return out2.reshape(orig_shape)


def _reference_f32(x):
    return jax.nn.softplus(x.astype(jnp.float32)) - jnp.float32(_SHIFT)


if __name__ == "__main__":
    key = jax.random.PRNGKey(0)
    k1, k2, k3 = jax.random.split(key, 3)

    # f32, lane-aligned case: SchNet-like activation block [batch, nodes, hidden].
    x = 5.0 * jax.random.normal(k1, (2, 64, 128), dtype=jnp.float32)
    out = jax.block_until_ready(shifted_softplus(x))
    ref = _reference_f32(x)
    assert out.shape == x.shape and out.dtype == x.dtype
    assert bool(jnp.all(jnp.isfinite(out)))
    assert bool(jnp.allclose(out, ref, rtol=1e-5, atol=1e-5))

    # bf16 case: native-dtype streaming through the kernel, f32 math inside.
    xb = (5.0 * jax.random.normal(k2, (2, 64, 128), dtype=jnp.float32)).astype(jnp.bfloat16)
    out_b = jax.block_until_ready(shifted_softplus(xb))
    ref_b = _reference_f32(xb).astype(jnp.bfloat16)
    assert out_b.shape == xb.shape and out_b.dtype == jnp.bfloat16
    assert bool(jnp.all(jnp.isfinite(out_b.astype(jnp.float32))))
    assert bool(
        jnp.allclose(
            out_b.astype(jnp.float32), ref_b.astype(jnp.float32), rtol=1e-2, atol=1e-2
        )
    )

    # Ragged / unaligned case exercises the tiny-tail pad + slice path.
    x_ragged = 5.0 * jax.random.normal(k3, (3, 7, 65), dtype=jnp.float32)
    out_r = jax.block_until_ready(shifted_softplus(x_ragged))
    ref_r = _reference_f32(x_ragged)
    assert out_r.shape == x_ragged.shape
    assert bool(jnp.all(jnp.isfinite(out_r)))
    assert bool(jnp.allclose(out_r, ref_r, rtol=1e-5, atol=1e-5))

    print("KERNEL_OK")
</pallas_src>

<mosaic_0001>
module attributes {stable_mosaic.version = 11 : i64} {
  func.func @_shifted_softplus_kernel(%arg0: i32, %arg1: memref<8x1024xf32, #tpu.memory_space<vmem>>, %arg2: memref<8x1024xf32, #tpu.memory_space<vmem>>) attributes {dimension_semantics = [#tpu.dimension_semantics<parallel>], iteration_bounds = array<i64: 2>, scalar_prefetch = 0 : i64, scratch_operands = 0 : i64, tpu.core_type = #tpu.core_type<tc>, window_params = [{transform_indices = @transform_0, window_bounds = array<i64: 8, 1024>}, {transform_indices = @transform_1, window_bounds = array<i64: 8, 1024>}]} {
    %c0 = arith.constant 0 : index
    %c0_0 = arith.constant 0 : index
    %0 = vector.load %arg1[%c0, %c0_0] : memref<8x1024xf32, #tpu.memory_space<vmem>>, vector<8x1024xf32>
    %cst = arith.constant 0.000000e+00 : f32
    %1 = vector.broadcast %cst : f32 to vector<8x1024xf32>
    %2 = arith.maximumf %0, %1 : vector<8x1024xf32>
    %3 = math.absf %0 : vector<8x1024xf32>
    %cst_1 = arith.constant 0.000000e+00 : f32
    %4 = vector.broadcast %cst_1 : f32 to vector<8x1024xf32>
    %5 = arith.subf %4, %3 : vector<8x1024xf32>
    %6 = math.exp %5 : vector<8x1024xf32>
    %7 = math.log1p %6 : vector<8x1024xf32>
    %8 = arith.addf %2, %7 : vector<8x1024xf32>
    %cst_2 = arith.constant 0.693147182 : f32
    %9 = vector.broadcast %cst_2 : f32 to vector<8x1024xf32>
    %10 = arith.subf %8, %9 : vector<8x1024xf32>
    %c0_3 = arith.constant 0 : index
    %c0_4 = arith.constant 0 : index
    %11 = vector.load %arg2[%c0_3, %c0_4] : memref<8x1024xf32, #tpu.memory_space<vmem>>, vector<8x1024xf32>
    tpu.vector_store %arg2[%c0_3, %c0_4], %10 {strides = array<i32>} : memref<8x1024xf32, #tpu.memory_space<vmem>>, vector<8x1024xf32>,
    return
  }
  func.func @transform_0(%arg0: i32) -> (i32, i32) {
    %c0_i32 = arith.constant 0 : i32
    %c0_i32_0 = arith.constant 0 : i32
    return %arg0, %c0_i32 : i32, i32
  }
  func.func @transform_1(%arg0: i32) -> (i32, i32) {
    %c0_i32 = arith.constant 0 : i32
    %c0_i32_0 = arith.constant 0 : i32
    return %arg0, %c0_i32 : i32, i32
  }
}

</mosaic_0001>

<llo_original>
// kernel: tpu_custom_call.1
$region0: #{tpu_custom_call.1}
  #allocation0 [shape = 'u32[]', space=smem, size = 0x4, offset = 0x4, fixed_abs, tag = 'smem constant byte address 0x4 - core index']
  #allocation1 [shape = 'u32[144,128]{1,0:T(1,128)}', space=vmem, size = 0x12000, scoped, tag = 'internal scratch']
  %s0 = inlined_call_operand.hbm [shape: f32[16,1024], index: 0, kind: input, shape index: {}]
  %s1 = inlined_call_operand.hbm [shape: f32[16,1024], index: 1, kind: output, shape index: {}]
  %s2 = sld [smem:[#allocation0]]
  $region41: #{tpu_custom_call.1} parent=0
    _
  %s4 = ssub.s32 1, %s2
  %s5 = scalar_select 0, %s4, %s2
  $region1: #{tpu_custom_call.1} parent=0
    #allocation2 [shape = 'u8[65536]{0}', space=vmem, size = 0x10000, scoped, tag = 'input window, operand 0']
    #allocation3 [shape = 's32[2]{0}', space=sflag, size = 0x8, scoped, tag = 'scoped memory for tpu_custom_call.1']
    #allocation4 [shape = 's32[2]{0}', space=sflag, size = 0x8, scoped, tag = 'scoped memory for tpu_custom_call.1']
    #allocation5 [shape = 'u8[65536]{0}', space=vmem, size = 0x10000, scoped, tag = 'output window, operand 0']
    %6 = vsyncpa [#allocation3], 0
    %s7 = scalar_lea.sflag [#allocation3], 1
    %8 = vsyncpa %s7, 0
    %9 = vsyncpa [#allocation4], 0
    %s10 = scalar_lea.sflag [#allocation4], 1
    %11 = vsyncpa %s10, 0
    loop: start=0, step=1, limit=4
    $region2: #{tpu_custom_call.1} parent=1 // loop_pre_header
      _
    $region3: #{tpu_custom_call.1} parent=1 // loop_header
      %s13 = sphi 0, %s17
      %p14 = scmp.ge.s32.totalorder %s13, 4
      %s23 = sphi 0, %s25
      %s26 = sphi 0, %s23
      %s27 = sphi 0, %s26
      %s43 = sphi 0, %s27
      %s49 = sphi 0, %s51
      %s52 = sphi 0, %s49
      %s53 = sphi 0, %s52
      %s69 = sphi 0, %s53
    $region4: #{tpu_custom_call.1} parent=1 // loop_header_branch
      %16 = sbr.rel (%p14) target = $region8
    $region5: #{tpu_custom_call.1} parent=1 // loop_body
      %s18 = ssub.s32 %s13, 1
      %s19 = ssub.s32 %s13, 2
      %s20 = sadd.s32 %s13, 1
      %s21 = ssub.s32 %s13, %s20
      %p22 = scmp.eq.s32.totalorder %s21, 0
      %s24 = sadd.s32 %s23, 1
      %s25 = scalar_select %p22, %s23, %s24
      %p28 = pneg %p22
      %p29 = scmp.eq.s32.totalorder %s13, 1
      %p30 = por %p28, %p29
      %p31 = scmp.ne.s32.totalorder %s23, %s26
      %p32 = scmp.eq.s32.totalorder %s13, 0
      %p33 = por %p31, %p32
      %p34 = scmp.ne.s32.totalorder %s23, %s26
      %p35 = scmp.eq.s32.totalorder %s18, 1
      %p36 = por %p34, %p35
      %p37 = scmp.ne.s32.totalorder %s26, %s27
      %p38 = scmp.eq.s32.totalorder %s18, 0
      %p39 = por %p37, %p38
      %p40 = scmp.ne.s32.totalorder %s26, %s27
      %p41 = scmp.eq.s32.totalorder %s19, 1
      %p42 = por %p40, %p41
      %p44 = scmp.ne.s32.totalorder %s27, %s43
      %p45 = scmp.eq.s32.totalorder %s19, 0
      %p46 = por %p44, %p45
      %s47 = ssub.s32 %s13, %s20
      %p48 = scmp.eq.s32.totalorder %s47, 0
      %s50 = sadd.s32 %s49, 1
      %s51 = scalar_select %p48, %s49, %s50
      %p54 = pneg %p48
      %p55 = scmp.eq.s32.totalorder %s13, 1
      %p56 = por %p54, %p55
      %p57 = scmp.ne.s32.totalorder %s49, %s52
      %p58 = scmp.eq.s32.totalorder %s13, 0
      %p59 = por %p57, %p58
      %p60 = scmp.ne.s32.totalorder %s49, %s52
      %p61 = scmp.eq.s32.totalorder %s18, 1
      %p62 = por %p60, %p61
      %p63 = scmp.ne.s32.totalorder %s52, %s53
      %p64 = scmp.eq.s32.totalorder %s18, 0
      %p65 = por %p63, %p64
      %p66 = scmp.ne.s32.totalorder %s52, %s53
      %p67 = scmp.eq.s32.totalorder %s19, 1
      %p68 = por %p66, %p67
      %p70 = scmp.ne.s32.totalorder %s53, %s69
      %p71 = scmp.eq.s32.totalorder %s19, 0
      %p72 = por %p70, %p71
      %p73 = scmp.le.s32.totalorder 1, %s13
      %p74 = scmp.lt.s32.totalorder %s13, 3
      %p75 = pnand %p73, %p74
      %p76 = pneg %p75
      // Predicated region
      $region9: #{tpu_custom_call.1} parent=5 // pred_check
        _
      $region10: #{tpu_custom_call.1} parent=5 // pred_check_branch
        %78 = sbr.rel (%p75) target = $region12
      $region11: #{tpu_custom_call.1} parent=5 // pred_region
        %s79 = ssub.s32 %s13, 1
      $region12: #{tpu_custom_call.1} parent=5 // pred_fallthru
        _
      %p80 = scmp.lt.s32.totalorder %s13, 2
      // Predicated region
      $region13: #{tpu_custom_call.1} parent=5 // pred_check
        %p81 = pneg %p80
      $region14: #{tpu_custom_call.1} parent=5 // pred_check_branch
        %83 = sbr.rel (%p81) target = $region16
      $region15: #{tpu_custom_call.1} parent=5 // pred_region
        // Predicated region
        $region17: #{tpu_custom_call.1} parent=15 // pred_check
          %p84 = pneg %p33
        $region18: #{tpu_custom_call.1} parent=15 // pred_check_branch
          %86 = sbr.rel (%p84) target = $region20
        $region19: #{tpu_custom_call.1} parent=15 // pred_region
          %s87 = sand.u32 %s23, 1
          %s88 = scalar_lea.sflag [#allocation3], %s87
          %s89 = sand.u32 %s23, 1
          %s90 = smul.addr %s89, 64
          %s91 = scalar_lea.vmem [#allocation2], %s90
          %s93 = ssub.s32 1024, 1024
          %94 = vsyncadd %s88, %s93
          %s95 = smul.addr %s13, 8
          %s96 = smul.addr %s95, 128
          %s97 = scalar_lea.hbm %s0, %s96
          %s99 = sshll.u32 %s91, 4
          %s100 = int_to_ptr.vmem [resolvable:$true] %s99
          %102 = dma.hbm_to_vmem [thread:$0]  %s97, 1024, %s100, %s88
        $region20: #{tpu_custom_call.1} parent=15 // pred_fallthru
          _
      $region16: #{tpu_custom_call.1} parent=5 // pred_fallthru
        _
      %p103 = scmp.le.s32.totalorder 1, %s13
      %p104 = scmp.lt.s32.totalorder %s13, 3
      %p105 = pnand %p103, %p104
      %p106 = pneg %p105
      // Predicated region
      $region21: #{tpu_custom_call.1} parent=5 // pred_check
        _
      $region22: #{tpu_custom_call.1} parent=5 // pred_check_branch
        %108 = sbr.rel (%p105) target = $region24
      $region23: #{tpu_custom_call.1} parent=5 // pred_region
        %s109 = ssub.s32 %s13, 1
        %s110 = sand.u32 %s26, 1
        %s111 = scalar_lea.sflag [#allocation3], %s110
        %s112 = sand.u32 %s26, 1
        %s113 = smul.addr %s112, 64
        %s114 = scalar_lea.vmem [#allocation2], %s113
        // Predicated region
        $region25: #{tpu_custom_call.1} parent=23 // pred_check
          %p115 = pneg %p39
        $region26: #{tpu_custom_call.1} parent=23 // pred_check_branch
          %117 = sbr.rel (%p115) target = $region28
        $region27: #{tpu_custom_call.1} parent=23 // pred_region
          %118 = dma.done %s111, 1024
        $region28: #{tpu_custom_call.1} parent=23 // pred_fallthru
          _
        %s119 = sand.u32 %s26, 1
        %s120 = scalar_lea.sflag [#allocation3], %s119
        %s121 = sand.u32 %s26, 1
        %s122 = smul.addr %s121, 64
        %s123 = scalar_lea.vmem [#allocation2], %s122
        %p124 = pneg %p39
        %p125 = pneg %p36
        %p126 = pneg %p65
        %p127 = pneg %p62
        %s128 = sand.u32 %s52, 1
        %s129 = scalar_lea.sflag [#allocation4], %s128
        %s130 = sand.u32 %s52, 1
        %s131 = smul.addr %s130, 64
        %s132 = scalar_lea.vmem [#allocation5], %s131
        %v133 = vld [vmem:[%s114] sm:$0xff]
        %v134 = vld [vmem:[%s114 + $0x8] sm:$0xff]
        %v135 = vld [vmem:[%s114 + $0x10] sm:$0xff]
        %v136 = vld [vmem:[%s114 + $0x18] sm:$0xff]
        %v137 = vld [vmem:[%s114 + $0x20] sm:$0xff]
        %v138 = vld [vmem:[%s114 + $0x28] sm:$0xff]
        %v139 = vld [vmem:[%s114 + $0x30] sm:$0xff]
        %v140 = vld [vmem:[%s114 + $0x38] sm:$0xff]
        %v141 = vmax.f32 %v133, 0.0
        %v142 = vmax.f32 %v134, 0.0
        %v143 = vmax.f32 %v135, 0.0
        %v144 = vmax.f32 %v136, 0.0
        %v145 = vmax.f32 %v137, 0.0
        %v146 = vmax.f32 %v138, 0.0
        %v147 = vmax.f32 %v139, 0.0
        %v148 = vmax.f32 %v140, 0.0
        %v149 = vand.u32 2147483647, %v133
        %v150 = vand.u32 2147483647, %v134
        %v151 = vand.u32 2147483647, %v135
        %v152 = vand.u32 2147483647, %v136
        %v153 = vand.u32 2147483647, %v137
        %v154 = vand.u32 2147483647, %v138
        %v155 = vand.u32 2147483647, %v139
        %v156 = vand.u32 2147483647, %v140
        %v157 = vsub.f32 0.0, %v149
        %v158 = vsub.f32 0.0, %v150
        %v159 = vsub.f32 0.0, %v151
        %v160 = vsub.f32 0.0, %v152
        %v161 = vsub.f32 0.0, %v153
        %v162 = vsub.f32 0.0, %v154
        %v163 = vsub.f32 0.0, %v155
        %v164 = vsub.f32 0.0, %v156
        %v165 = vmul.f32 %v157, 1.442695
        %v166 = vpow.pop %v165
        %v167 = vmul.f32 %v158, 1.442695
        %v168 = vpow.pop %v167
        %v169 = vmul.f32 %v159, 1.442695
        %v170 = vpow.pop %v169
        %v171 = vmul.f32 %v160, 1.442695
        %v172 = vpow.pop %v171
        %v173 = vmul.f32 %v161, 1.442695
        %v174 = vpow.pop %v173
        %v175 = vmul.f32 %v162, 1.442695
        %v176 = vpow.pop %v175
        %v177 = vmul.f32 %v163, 1.442695
        %v178 = vpow.pop %v177
        %v179 = vmul.f32 %v164, 1.442695
        %v180 = vpow.pop %v179
        %v181 = vadd.f32 %v166, 1.0
        %v182 = vlog2.pop %v181
        %v183 = vmul.f32 %v182, 0.6931472
        %v184 = vmul.f32 -0.5, %v166
        %v185 = vadd.f32 %v184, 1.0
        %v186 = vmul.f32 %v185, %v166
        %v187 = vand.u32 2147483647, %v166
        %vm188 = vcmp.lt.f32.partialorder %v187, 0.0004427343
        %v189 = vsel %vm188, %v186, %v183
        %v190 = vadd.f32 %v168, 1.0
        %v191 = vlog2.pop %v190
        %v192 = vmul.f32 %v191, 0.6931472
        %v193 = vmul.f32 -0.5, %v168
        %v194 = vadd.f32 %v193, 1.0
        %v195 = vmul.f32 %v194, %v168
        %v196 = vand.u32 2147483647, %v168
        %vm197 = vcmp.lt.f32.partialorder %v196, 0.0004427343
        %v198 = vsel %vm197, %v195, %v192
        %v199 = vadd.f32 %v170, 1.0
        %v200 = vlog2.pop %v199
        %v201 = vmul.f32 %v200, 0.6931472
        %v202 = vmul.f32 -0.5, %v170
        %v203 = vadd.f32 %v202, 1.0
        %v204 = vmul.f32 %v203, %v170
        %v205 = vand.u32 2147483647, %v170
        %vm206 = vcmp.lt.f32.partialorder %v205, 0.0004427343
        %v207 = vsel %vm206, %v204, %v201
        %v208 = vadd.f32 %v172, 1.0
        %v209 = vlog2.pop %v208
        %v210 = vmul.f32 %v209, 0.6931472
        %v211 = vmul.f32 -0.5, %v172
        %v212 = vadd.f32 %v211, 1.0
        %v213 = vmul.f32 %v212, %v172
        %v214 = vand.u32 2147483647, %v172
        %vm215 = vcmp.lt.f32.partialorder %v214, 0.0004427343
        %v216 = vsel %vm215, %v213, %v210
        %v217 = vadd.f32 %v174, 1.0
        %v218 = vlog2.pop %v217
        %v219 = vmul.f32 %v218, 0.6931472
        %v220 = vmul.f32 -0.5, %v174
        %v221 = vadd.f32 %v220, 1.0
        %v222 = vmul.f32 %v221, %v174
        %v223 = vand.u32 2147483647, %v174
        %vm224 = vcmp.lt.f32.partialorder %v223, 0.0004427343
        %v225 = vsel %vm224, %v222, %v219
        %v226 = vadd.f32 %v176, 1.0
        %v227 = vlog2.pop %v226
        %v228 = vmul.f32 %v227, 0.6931472
        %v229 = vmul.f32 -0.5, %v176
        %v230 = vadd.f32 %v229, 1.0
        %v231 = vmul.f32 %v230, %v176
        %v232 = vand.u32 2147483647, %v176
        %vm233 = vcmp.lt.f32.partialorder %v232, 0.0004427343
        %v234 = vsel %vm233, %v231, %v228
        %v235 = vadd.f32 %v178, 1.0
        %v236 = vlog2.pop %v235
        %v237 = vmul.f32 %v236, 0.6931472
        %v238 = vmul.f32 -0.5, %v178
        %v239 = vadd.f32 %v238, 1.0
        %v240 = vmul.f32 %v239, %v178
        %v241 = vand.u32 2147483647, %v178
        %vm242 = vcmp.lt.f32.partialorder %v241, 0.0004427343
        %v243 = vsel %vm242, %v240, %v237
        %v244 = vadd.f32 %v180, 1.0
        %v245 = vlog2.pop %v244
        %v246 = vmul.f32 %v245, 0.6931472
        %v247 = vmul.f32 -0.5, %v180
        %v248 = vadd.f32 %v247, 1.0
        %v249 = vmul.f32 %v248, %v180
        %v250 = vand.u32 2147483647, %v180
        %vm251 = vcmp.lt.f32.partialorder %v250, 0.0004427343
        %v252 = vsel %vm251, %v249, %v246
        %v253 = vadd.f32 %v141, %v189
        %v254 = vadd.f32 %v142, %v198
        %v255 = vadd.f32 %v143, %v207
        %v256 = vadd.f32 %v144, %v216
        %v257 = vadd.f32 %v145, %v225
        %v258 = vadd.f32 %v146, %v234
        %v259 = vadd.f32 %v147, %v243
        %v260 = vadd.f32 %v148, %v252
        %v261 = vsub.f32 %v253, 0.6931472
        %v262 = vsub.f32 %v254, 0.6931472
        %v263 = vsub.f32 %v255, 0.6931472
        %v264 = vsub.f32 %v256, 0.6931472
        %v265 = vsub.f32 %v257, 0.6931472
        %v266 = vsub.f32 %v258, 0.6931472
        %v267 = vsub.f32 %v259, 0.6931472
        %v268 = vsub.f32 %v260, 0.6931472
        %269 = vst [vmem:[%s132] sm:$0xff] %v261
        %270 = vst [vmem:[%s132 + $0x8] sm:$0xff] %v262
        %271 = vst [vmem:[%s132 + $0x10] sm:$0xff] %v263
        %272 = vst [vmem:[%s132 + $0x18] sm:$0xff] %v264
        %273 = vst [vmem:[%s132 + $0x20] sm:$0xff] %v265
        %274 = vst [vmem:[%s132 + $0x28] sm:$0xff] %v266
        %275 = vst [vmem:[%s132 + $0x30] sm:$0xff] %v267
        %276 = vst [vmem:[%s132 + $0x38] sm:$0xff] %v268
        %s277 = sand.u32 %s52, 1
        %s278 = scalar_lea.sflag [#allocation4], %s277
        %s279 = sand.u32 %s52, 1
        %s280 = smul.addr %s279, 64
        %s281 = scalar_lea.vmem [#allocation5], %s280
        // Predicated region
        $region29: #{tpu_custom_call.1} parent=23 // pred_check
          %p282 = pneg %p62
        $region30: #{tpu_custom_call.1} parent=23 // pred_check_branch
          %284 = sbr.rel (%p282) target = $region32
        $region31: #{tpu_custom_call.1} parent=23 // pred_region
          %s286 = ssub.s32 1024, 1024
          %287 = vsyncadd %s278, %s286
          %s288 = smul.addr %s18, 8
          %s289 = smul.addr %s288, 128
          %s290 = scalar_lea.hbm %s1, %s289
          %s292 = sshll.u32 %s281, 4
          %s293 = int_to_ptr.vmem [resolvable:$true] %s292
          %295 = dma.vmem_to_hbm [thread:$0]  %s293, 1024, %s290, %s278
        $region32: #{tpu_custom_call.1} parent=23 // pred_fallthru
          _
      $region24: #{tpu_custom_call.1} parent=5 // pred_fallthru
        _
      %p296 = scmp.le.s32.totalorder 2, %s13
      // Predicated region
      $region33: #{tpu_custom_call.1} parent=5 // pred_check
        %p297 = pneg %p296
      $region34: #{tpu_custom_call.1} parent=5 // pred_check_branch
        %299 = sbr.rel (%p297) target = $region36
      $region35: #{tpu_custom_call.1} parent=5 // pred_region
        %s300 = ssub.s32 %s13, 2
        // Predicated region
        $region37: #{tpu_custom_call.1} parent=35 // pred_check
          %p301 = pneg %p68
        $region38: #{tpu_custom_call.1} parent=35 // pred_check_branch
          %303 = sbr.rel (%p301) target = $region40
        $region39: #{tpu_custom_call.1} parent=35 // pred_region
          %s304 = sand.u32 %s53, 1
          %s305 = scalar_lea.sflag [#allocation4], %s304
          %s306 = sand.u32 %s53, 1
          %s307 = smul.addr %s306, 64
          %s308 = scalar_lea.vmem [#allocation5], %s307
          %309 = dma.done %s305, 1024
        $region40: #{tpu_custom_call.1} parent=35 // pred_fallthru
          _
      $region36: #{tpu_custom_call.1} parent=5 // pred_fallthru
        _
    $region6: #{tpu_custom_call.1} parent=1 // loop_footer
      %s17 = sadd.s32 1, %s13
    $region7: #{tpu_custom_call.1} parent=1 // loop_footer_branch
      %12 = sbr.rel target = $region3
    $region8: #{tpu_custom_call.1} parent=1 // loop_exit
      _
    %310 = vsyncpa [#allocation3], 1
    %s311 = scalar_lea.sflag [#allocation3], 1
    %312 = vsyncpa %s311, 1
    %313 = vsyncpa [#allocation4], 1
    %s314 = scalar_lea.sflag [#allocation4], 1
    %315 = vsyncpa %s314, 1

</llo_original>
